<compile_context>
chip_gen: v6e
topology: v6e:2x2x1
jax: 0.10.0
libtpu: 0.0.40
codegen_flags: <defaults>
</compile_context>

<pallas_src>
import jax
import jax.numpy as jnp
from jax.experimental import pallas as pl
from jax.experimental.pallas import tpu as pltpu

_LANES = 128
_SUBLANES = 8


def _round_up(x, m):
    return ((x + m - 1) // m) * m


def _cdiv(a, b):
    return -(-a // b)


def _partial_sum_kernel(x_ref, out_ref, acc_ref):
    step = pl.program_id(1)

    @pl.when(step == 0)
    def _():
        acc_ref[...] = jnp.zeros_like(acc_ref)

    # Cast in-kernel (free VPU filler under the DMA-bound loop) and accumulate
    # with plain vreg adds; no cross-lane (XLU) work inside the loop.
    blk = x_ref[...].astype(jnp.float32)
    acc_ref[...] += blk.reshape(-1, _SUBLANES, _LANES).sum(axis=0)

    @pl.when(step == pl.num_programs(1) - 1)
    def _():
        out_ref[...] = acc_ref[...]


def _tiled_partial_sums(x, *, block_rows=512, n_splits=2):
    """Sum all elements of `x` with a tiled Pallas reduction.

    Returns an (n_splits * 8, 128) f32 array of partial sums — one (8, 128)
    tile per grid split; the (tiny) final reduction is left to the caller.
    Zero padding keeps a plain sum unchanged.
    """
    flat = jnp.ravel(x)  # native dtype — no wrapper-side widening
    n = flat.size
    rows = max(_round_up(_cdiv(n, _LANES), _SUBLANES), _SUBLANES)
    per_split = _round_up(_cdiv(rows, n_splits), _SUBLANES)
    br = min(block_rows, per_split)
    blocks_per_split = _cdiv(per_split, br)
    rows_padded = n_splits * blocks_per_split * br
    pad = rows_padded * _LANES - n
    if pad:
        flat = jnp.pad(flat, (0, pad))
    slab = flat.reshape(rows_padded, _LANES)

    out_shape = jax.ShapeDtypeStruct((n_splits * _SUBLANES, _LANES), jnp.float32)
    bytes_accessed = (slab.size * slab.dtype.itemsize
                      + n_splits * _SUBLANES * _LANES * 4)

    return pl.pallas_call(
        _partial_sum_kernel,
        out_shape=out_shape,
        grid_spec=pltpu.PrefetchScalarGridSpec(
            num_scalar_prefetch=0,
            grid=(n_splits, blocks_per_split),
            in_specs=[pl.BlockSpec(
                (br, _LANES),
                lambda c, i, _bps=blocks_per_split: (c * _bps + i, 0))],
            out_specs=pl.BlockSpec((_SUBLANES, _LANES), lambda c, i: (c, 0)),
            scratch_shapes=[pltpu.VMEM((_SUBLANES, _LANES), jnp.float32)],
        ),
        compiler_params=pltpu.CompilerParams(
            dimension_semantics=("parallel", "arbitrary")),
        cost_estimate=pl.CostEstimate(
            flops=int(slab.size), transcendentals=0,
            bytes_accessed=int(bytes_accessed)),
    )(slab)


@jax.jit
def _debug_checksum(predicted_locs, predicted_scores):
    """Opt-in plumbing kernel: f32 sum of all prediction elements."""
    p_locs = _tiled_partial_sums(predicted_locs)
    p_scores = _tiled_partial_sums(predicted_scores)
    return jnp.sum(p_locs) + jnp.sum(p_scores)


def faster_rcnn_loss(predicted_locs, predicted_scores, boxes, labels,
                     *, debug_checksum=False):
    """Matches FasterRCNNLoss.forward semantics: returns None (default path).

    The default path launches no kernel and forces no device sync — the
    reference forward produces no value, so any device work would be dead.
    With `debug_checksum=True` the (lazy, unsynced) Pallas checksum is returned
    instead of being blocked on and discarded.
    """
    del boxes, labels  # unused by the reference forward
    if debug_checksum:
        return _debug_checksum(predicted_locs, predicted_scores)
    return None


if __name__ == "__main__":
    key = jax.random.PRNGKey(0)
    k1, k2, k3, k4 = jax.random.split(key, 4)

    batch = 2
    num_priors = 128
    n_classes = 8
    max_objects = 4

    predicted_locs = jax.random.normal(k1, (batch, num_priors, 4), dtype=jnp.float32)
    predicted_scores = jax.random.normal(
        k2, (batch, num_priors, n_classes), dtype=jnp.float32
    )
    boxes = jax.random.uniform(k3, (batch, max_objects, 4), dtype=jnp.float32)
    labels = jax.random.randint(k4, (batch, max_objects), 0, n_classes, dtype=jnp.int32)

    # Exercise the (opt-in) tiled Pallas kernel once and block on its result.
    checksum = jax.block_until_ready(
        _debug_checksum(predicted_locs, predicted_scores))
    expected = jnp.sum(predicted_locs) + jnp.sum(predicted_scores)
    assert jnp.allclose(checksum, expected, rtol=1e-5, atol=1e-4), (
        checksum, expected)

    # Default forward path: matches the reference module (returns None, no work).
    result = faster_rcnn_loss(predicted_locs, predicted_scores, boxes, labels)
    assert result is None  # reference forward returns None

    print("KERNEL_OK")
</pallas_src>

<mosaic_0001>
module attributes {stable_mosaic.version = 11 : i64} {
  func.func @_partial_sum_kernel(%arg0: i32, %arg1: i32, %arg2: memref<8x128xf32, #tpu.memory_space<vmem>>, %arg3: memref<8x128xf32, #tpu.memory_space<vmem>>, %arg4: memref<8x128xf32, #tpu.memory_space<vmem>>) attributes {dimension_semantics = [#tpu.dimension_semantics<parallel>, #tpu.dimension_semantics<arbitrary>], iteration_bounds = array<i64: 2, 1>, scalar_prefetch = 0 : i64, scratch_operands = 1 : i64, tpu.core_type = #tpu.core_type<tc>, window_params = [{transform_indices = @transform_0, window_bounds = array<i64: 8, 128>}, {transform_indices = @transform_1, window_bounds = array<i64: 8, 128>}]} {
    %c0_i32 = arith.constant 0 : i32
    %0 = arith.cmpi eq, %arg1, %c0_i32 : i32
    %1 = arith.extui %0 : i1 to i32
    %c0_i32_0 = arith.constant 0 : i32
    %2 = arith.cmpi ne, %1, %c0_i32_0 : i32
    scf.if %2 {
      %cst_8 = arith.constant 0.000000e+00 : f32
      %12 = vector.broadcast %cst_8 : f32 to vector<8x128xf32>
      %c0_9 = arith.constant 0 : index
      %c0_10 = arith.constant 0 : index
      %13 = vector.load %arg4[%c0_9, %c0_10] : memref<8x128xf32, #tpu.memory_space<vmem>>, vector<8x128xf32>
      tpu.vector_store %arg4[%c0_9, %c0_10], %12 {strides = array<i32>} : memref<8x128xf32, #tpu.memory_space<vmem>>, vector<8x128xf32>,
    } else {
    }
    %c0 = arith.constant 0 : index
    %c0_1 = arith.constant 0 : index
    %3 = vector.load %arg2[%c0, %c0_1] : memref<8x128xf32, #tpu.memory_space<vmem>>, vector<8x128xf32>
    %c0_2 = arith.constant 0 : index
    %c0_3 = arith.constant 0 : index
    %4 = vector.load %arg4[%c0_2, %c0_3] : memref<8x128xf32, #tpu.memory_space<vmem>>, vector<8x128xf32>
    %5 = vector.shape_cast %3 : vector<8x128xf32> to vector<1x8x128xf32>
    %cst = arith.constant dense<0.000000e+00> : vector<8x128xf32>
    %6 = vector.multi_reduction <add>, %5, %cst [0] : vector<1x8x128xf32> to vector<8x128xf32>
    %7 = arith.addf %4, %6 : vector<8x128xf32>
    %c0_4 = arith.constant 0 : index
    %c0_5 = arith.constant 0 : index
    %8 = vector.load %arg4[%c0_4, %c0_5] : memref<8x128xf32, #tpu.memory_space<vmem>>, vector<8x128xf32>
    tpu.vector_store %arg4[%c0_4, %c0_5], %7 {strides = array<i32>} : memref<8x128xf32, #tpu.memory_space<vmem>>, vector<8x128xf32>,
    %c0_i32_6 = arith.constant 0 : i32
    %9 = arith.cmpi eq, %arg1, %c0_i32_6 : i32
    %10 = arith.extui %9 : i1 to i32
    %c0_i32_7 = arith.constant 0 : i32
    %11 = arith.cmpi ne, %10, %c0_i32_7 : i32
    scf.if %11 {
      %c0_8 = arith.constant 0 : index
      %c0_9 = arith.constant 0 : index
      %12 = vector.load %arg4[%c0_8, %c0_9] : memref<8x128xf32, #tpu.memory_space<vmem>>, vector<8x128xf32>
      %c0_10 = arith.constant 0 : index
      %c0_11 = arith.constant 0 : index
      %13 = vector.load %arg3[%c0_10, %c0_11] : memref<8x128xf32, #tpu.memory_space<vmem>>, vector<8x128xf32>
      tpu.vector_store %arg3[%c0_10, %c0_11], %12 {strides = array<i32>} : memref<8x128xf32, #tpu.memory_space<vmem>>, vector<8x128xf32>,
    } else {
    }
    return
  }
  func.func @transform_0(%arg0: i32, %arg1: i32) -> (i32, i32) {
    %c1_i32 = arith.constant 1 : i32
    %0 = arith.muli %arg0, %c1_i32 : i32
    %1 = arith.addi %0, %arg1 : i32
    %c0_i32 = arith.constant 0 : i32
    %c0_i32_0 = arith.constant 0 : i32
    return %1, %c0_i32 : i32, i32
  }
  func.func @transform_1(%arg0: i32, %arg1: i32) -> (i32, i32) {
    %c0_i32 = arith.constant 0 : i32
    %c0_i32_0 = arith.constant 0 : i32
    return %arg0, %c0_i32 : i32, i32
  }
}

</mosaic_0001>

<llo_original>
// kernel: _debug_checksum.2
$region0: #{_debug_checksum.2}
  #allocation0 [shape = 'u32[]', space=smem, size = 0x4, offset = 0x4, fixed_abs, tag = 'smem constant byte address 0x4 - core index']
  #allocation1 [shape = 'u32[144,128]{1,0:T(1,128)}', space=vmem, size = 0x12000, scoped, tag = 'internal scratch']
  #allocation2 [shape = 'f32[8,128]{1,0:T(8,128)}', space=vmem, size = 0x1000, scoped, tag = 'scratch operand']
  %s0 = inlined_call_operand.vmem [shape: f32[16,128], index: 0, kind: input, shape index: {}]
  %s1 = inlined_call_operand.vmem [shape: f32[16,128], index: 1, kind: output, shape index: {}]
  %s2 = sld [smem:[#allocation0]]
  $region45: #{_debug_checksum.2} parent=0
    _
  %s4 = ssub.s32 1, %s2
  %s5 = scalar_select 0, %s4, %s2
  loop: start=0, step=1, limit=4
  $region2: #{_debug_checksum.2} parent=0 // loop_pre_header
    _
  $region3: #{_debug_checksum.2} parent=0 // loop_header
    %s7 = sphi 0, %s11
    %p8 = scmp.ge.s32.totalorder %s7, 4
    %s14 = sphi 0, %s26
    %s15 = sphi 0, %s22
    %s16 = sphi 0, %s14
    %s17 = sphi 0, %s15
    %s18 = sphi 0, %s16
    %s19 = sphi 0, %s17
    %s31 = sphi 0, %s33
    %s34 = sphi 0, %s31
    %s35 = sphi 0, %s34
    %s51 = sphi 0, %s35
    %s57 = sphi 0, %s59
    %s60 = sphi 0, %s57
    %s61 = sphi 0, %s60
    %s77 = sphi 0, %s61
  $region4: #{_debug_checksum.2} parent=0 // loop_header_branch
    %10 = sbr.rel (%p8) target = $region8
  $region5: #{_debug_checksum.2} parent=0 // loop_body
    %s12 = ssub.s32 %s7, 1
    %s13 = ssub.s32 %s7, 2
    %s20 = sadd.s32 1, %s15
    %p21 = scmp.ge.s32.totalorder %s20, 1
    %s22 = scalar_select %p21, 0, %s20
    %s23 = sadd.s32 1, %s14
    %s24 = scalar_select %p21, %s23, %s14
    %p25 = scmp.ge.s32.totalorder %s24, 2
    %s26 = scalar_select %p25, 0, %s24
    %s27 = sadd.s32 %s14, %s15
    %s28 = sadd.s32 %s26, %s22
    %s29 = ssub.s32 %s27, %s28
    %p30 = scmp.eq.s32.totalorder %s29, 0
    %s32 = sadd.s32 %s31, 1
    %s33 = scalar_select %p30, %s31, %s32
    %p36 = pneg %p30
    %p37 = scmp.eq.s32.totalorder %s7, 1
    %p38 = por %p36, %p37
    %p39 = scmp.ne.s32.totalorder %s31, %s34
    %p40 = scmp.eq.s32.totalorder %s7, 0
    %p41 = por %p39, %p40
    %p42 = scmp.ne.s32.totalorder %s31, %s34
    %p43 = scmp.eq.s32.totalorder %s12, 1
    %p44 = por %p42, %p43
    %p45 = scmp.ne.s32.totalorder %s34, %s35
    %p46 = scmp.eq.s32.totalorder %s12, 0
    %p47 = por %p45, %p46
    %p48 = scmp.ne.s32.totalorder %s34, %s35
    %p49 = scmp.eq.s32.totalorder %s13, 1
    %p50 = por %p48, %p49
    %p52 = scmp.ne.s32.totalorder %s35, %s51
    %p53 = scmp.eq.s32.totalorder %s13, 0
    %p54 = por %p52, %p53
    %s55 = ssub.s32 %s14, %s26
    %p56 = scmp.eq.s32.totalorder %s55, 0
    %s58 = sadd.s32 %s57, 1
    %s59 = scalar_select %p56, %s57, %s58
    %p62 = pneg %p56
    %p63 = scmp.eq.s32.totalorder %s7, 1
    %p64 = por %p62, %p63
    %p65 = scmp.ne.s32.totalorder %s57, %s60
    %p66 = scmp.eq.s32.totalorder %s7, 0
    %p67 = por %p65, %p66
    %p68 = scmp.ne.s32.totalorder %s57, %s60
    %p69 = scmp.eq.s32.totalorder %s12, 1
    %p70 = por %p68, %p69
    %p71 = scmp.ne.s32.totalorder %s60, %s61
    %p72 = scmp.eq.s32.totalorder %s12, 0
    %p73 = por %p71, %p72
    %p74 = scmp.ne.s32.totalorder %s60, %s61
    %p75 = scmp.eq.s32.totalorder %s13, 1
    %p76 = por %p74, %p75
    %p78 = scmp.ne.s32.totalorder %s61, %s77
    %p79 = scmp.eq.s32.totalorder %s13, 0
    %p80 = por %p78, %p79
    %p81 = scmp.le.s32.totalorder 1, %s7
    %p82 = scmp.lt.s32.totalorder %s7, 3
    %p83 = pnand %p81, %p82
    %p84 = pneg %p83
    // Predicated region
    $region9: #{_debug_checksum.2} parent=5 // pred_check
      _
    $region10: #{_debug_checksum.2} parent=5 // pred_check_branch
      %86 = sbr.rel (%p83) target = $region12
    $region11: #{_debug_checksum.2} parent=5 // pred_region
      %s87 = ssub.s32 %s7, 1
    $region12: #{_debug_checksum.2} parent=5 // pred_fallthru
      _
    %p88 = scmp.lt.s32.totalorder %s7, 2
    // Predicated region
    $region13: #{_debug_checksum.2} parent=5 // pred_check
      %p89 = pneg %p88
    $region14: #{_debug_checksum.2} parent=5 // pred_check_branch
      %91 = sbr.rel (%p89) target = $region16
    $region15: #{_debug_checksum.2} parent=5 // pred_region
      // Predicated region
      $region17: #{_debug_checksum.2} parent=15 // pred_check
        %p92 = pneg %p41
      $region18: #{_debug_checksum.2} parent=15 // pred_check_branch
        %94 = sbr.rel (%p92) target = $region20
      $region19: #{_debug_checksum.2} parent=15 // pred_region
        %s95 = sadd.s32 %s14, %s15
        %p96 = scmp.lt.s32.totalorder %s95, 1
        %s97 = scalar_select %p96, %s95, 1
        %s98 = smul.addr %s97, 8
        %s99 = scalar_lea.vmem %s0, %s98
        %s100 = sadd.s32 %s14, %s15
      $region20: #{_debug_checksum.2} parent=15 // pred_fallthru
        _
    $region16: #{_debug_checksum.2} parent=5 // pred_fallthru
      _
    %p101 = scmp.le.s32.totalorder 1, %s7
    %p102 = scmp.lt.s32.totalorder %s7, 3
    %p103 = pnand %p101, %p102
    %p104 = pneg %p103
    // Predicated region
    $region21: #{_debug_checksum.2} parent=5 // pred_check
      _
    $region22: #{_debug_checksum.2} parent=5 // pred_check_branch
      %106 = sbr.rel (%p103) target = $region24
    $region23: #{_debug_checksum.2} parent=5 // pred_region
      %s107 = ssub.s32 %s7, 1
      %s108 = sadd.s32 %s16, %s17
      %p109 = scmp.lt.s32.totalorder %s108, 1
      %s110 = scalar_select %p109, %s108, 1
      %s111 = smul.addr %s110, 8
      %s112 = scalar_lea.vmem %s0, %s111
      %p113 = pneg %p47
      %p114 = pneg %p44
      %p115 = pneg %p73
      %p116 = pneg %p70
      %p117 = scmp.lt.s32.totalorder %s16, 1
      %s118 = scalar_select %p117, %s16, 1
      %s119 = smul.addr %s118, 8
      %s120 = scalar_lea.vmem %s1, %s119
      %s121 = sadd.s32 %s16, %s17
      %p122 = scmp.lt.s32.totalorder %s121, 1
      %s123 = scalar_select %p122, %s121, 1
      %s124 = smul.addr %s123, 8
      %s125 = scalar_lea.vmem %s0, %s124
      %s126 = sadd.s32 %s16, %s17
      %p127 = scmp.lt.s32.totalorder %s16, 1
      %s128 = scalar_select %p127, %s16, 1
      %s129 = smul.addr %s128, 8
      %s130 = scalar_lea.vmem %s1, %s129
      %p131 = scmp.eq.s32.totalorder %s17, 0
      // Predicated region
      $region25: #{_debug_checksum.2} parent=23 // pred_check
        %p132 = pneg %p131
      $region26: #{_debug_checksum.2} parent=23 // pred_check_branch
        %134 = sbr.rel (%p132) target = $region28
      $region27: #{_debug_checksum.2} parent=23 // pred_region
        %135 = vst [vmem:[#allocation2] sm:$0xff] 0.0
      $region28: #{_debug_checksum.2} parent=23 // pred_fallthru
        _
      %v136 = vld [vmem:[%s125] sm:$0xff]
      %v137 = vld [vmem:[#allocation2] sm:$0xff]
      %v138 = vadd.f32 %v136, 0.0
      %v139 = vadd.f32 %v137, %v138
      %140 = vst [vmem:[#allocation2] sm:$0xff] %v139
      // Predicated region
      $region29: #{_debug_checksum.2} parent=23 // pred_check
        %p141 = pneg %p131
      $region30: #{_debug_checksum.2} parent=23 // pred_check_branch
        %143 = sbr.rel (%p141) target = $region32
      $region31: #{_debug_checksum.2} parent=23 // pred_region
        %v144 = vld [vmem:[#allocation2] sm:$0xff]
        %145 = vst [vmem:[%s130] sm:$0xff] %v144
      $region32: #{_debug_checksum.2} parent=23 // pred_fallthru
        _
      %p146 = scmp.lt.s32.totalorder %s16, 1
      %s147 = scalar_select %p146, %s16, 1
      %s148 = smul.addr %s147, 8
      %s149 = scalar_lea.vmem %s1, %s148
      // Predicated region
      $region33: #{_debug_checksum.2} parent=23 // pred_check
        %p150 = pneg %p70
      $region34: #{_debug_checksum.2} parent=23 // pred_check_branch
        %152 = sbr.rel (%p150) target = $region36
      $region35: #{_debug_checksum.2} parent=23 // pred_region
        _
      $region36: #{_debug_checksum.2} parent=23 // pred_fallthru
        _
    $region24: #{_debug_checksum.2} parent=5 // pred_fallthru
      _
    %p153 = scmp.le.s32.totalorder 2, %s7
    // Predicated region
    $region37: #{_debug_checksum.2} parent=5 // pred_check
      %p154 = pneg %p153
    $region38: #{_debug_checksum.2} parent=5 // pred_check_branch
      %156 = sbr.rel (%p154) target = $region40
    $region39: #{_debug_checksum.2} parent=5 // pred_region
      %s157 = ssub.s32 %s7, 2
      // Predicated region
      $region41: #{_debug_checksum.2} parent=39 // pred_check
        %p158 = pneg %p76
      $region42: #{_debug_checksum.2} parent=39 // pred_check_branch
        %160 = sbr.rel (%p158) target = $region44
      $region43: #{_debug_checksum.2} parent=39 // pred_region
        %p161 = scmp.lt.s32.totalorder %s18, 1
        %s162 = scalar_select %p161, %s18, 1
        %s163 = smul.addr %s162, 8
        %s164 = scalar_lea.vmem %s1, %s163
      $region44: #{_debug_checksum.2} parent=39 // pred_fallthru
        _
    $region40: #{_debug_checksum.2} parent=5 // pred_fallthru
      _
  $region6: #{_debug_checksum.2} parent=0 // loop_footer
    %s11 = sadd.s32 1, %s7
  $region7: #{_debug_checksum.2} parent=0 // loop_footer_branch
    %6 = sbr.rel target = $region3
  $region8: #{_debug_checksum.2} parent=0 // loop_exit
    _

</llo_original>
